<compile_context>
chip_gen: v7x
topology: tpu7x:2x2x1
jax: 0.10.0
libtpu: 0.0.40
codegen_flags: <defaults>
</compile_context>

<pallas_src>
import functools

import jax
import jax.numpy as jnp
from jax.experimental import pallas as pl
from jax.experimental.pallas import tpu as pltpu


def critic_kernel(x_ref, w1_ref, b1_ref, w2_ref, b2_ref, w3_ref, b3_ref, o_ref):
    # Layer 1: (tile_b, S) bf16 @ (S, H) bf16 -> f32 acc, bias + ReLU in f32.
    # (K = state_dim is tiny; MXU underfill here is <5% of total FLOPs.)
    h1 = jnp.dot(x_ref[...], w1_ref[...], preferred_element_type=jnp.float32)
    h1 = jnp.maximum(h1 + b1_ref[...], 0.0)

    # Layer 2: dominant 256x256 matmul on the MXU, bf16 in / f32 acc.
    h2 = jnp.dot(h1.astype(jnp.bfloat16), w2_ref[...],
                 preferred_element_type=jnp.float32)
    h2 = jnp.maximum(h2 + b2_ref[...], 0.0)

    # Layer 3 (out_features = 1): VPU multiply + XLU lane reduction instead of
    # an MXU matmul that would use only 1 output column.
    w3_row = w3_ref[...].astype(jnp.float32)            # (1, H)
    y = jnp.sum(h2 * w3_row, axis=-1, keepdims=True)    # (tile_b, 1)
    o_ref[...] = (y + b3_ref[0, 0]).astype(o_ref.dtype)


def _round_up(n, m):
    return ((n + m - 1) // m) * m


@jax.jit
def critic_forward(x, w1, b1, w2, b2, w3, b3):
    B, S = x.shape
    H = w1.shape[1]

    # Tile choice: 512 (multiple of 128 -> full MXU M passes, ~0.5 MiB f32
    # intermediates per tile, well inside 32 MiB scoped VMEM even on v7x);
    # small batches just round up to the sublane multiple of 8.
    TILE_B = 512
    tb = TILE_B if B >= TILE_B else _round_up(B, 8)
    b_pad = _round_up(B, tb)

    x_p = x if b_pad == B else jnp.pad(x, ((0, b_pad - B), (0, 0)))

    # bf16 MXU inputs (halves weight residency and x DMA bytes); f32 biases.
    xb = x_p.astype(jnp.bfloat16)
    w1b = w1.astype(jnp.bfloat16)
    w2b = w2.astype(jnp.bfloat16)
    w3_row = w3.reshape(1, H).astype(jnp.bfloat16)
    b3_s = b3.reshape(1, 1)

    vmem = pltpu.MemorySpace.VMEM
    smem = pltpu.MemorySpace.SMEM

    out = pl.pallas_call(
        critic_kernel,
        out_shape=jax.ShapeDtypeStruct((b_pad, 1), jnp.float32),
        grid=(b_pad // tb,),
        in_specs=[
            pl.BlockSpec((tb, S), lambda i: (i, 0), memory_space=vmem),   # x tile
            pl.BlockSpec((S, H), lambda i: (0, 0), memory_space=vmem),    # w1 (resident)
            pl.BlockSpec((1, H), lambda i: (0, 0), memory_space=vmem),    # b1
            pl.BlockSpec((H, H), lambda i: (0, 0), memory_space=vmem),    # w2
            pl.BlockSpec((1, H), lambda i: (0, 0), memory_space=vmem),    # b2
            pl.BlockSpec((1, H), lambda i: (0, 0), memory_space=vmem),    # w3 row
            pl.BlockSpec((1, 1), lambda i: (0, 0), memory_space=smem),    # b3 scalar
        ],
        out_specs=pl.BlockSpec((tb, 1), lambda i: (i, 0), memory_space=vmem),
        compiler_params=pltpu.CompilerParams(
            dimension_semantics=("parallel",)),
    )(xb, w1b, b1, w2b, b2, w3_row, b3_s)

    return out[:B]


def init_critic_params(key, state_dim, size=256):
    """Mirrors Critic.__init__: weights ~ U(-0.001, 0.001); biases follow
    PyTorch Linear default U(-1/sqrt(fan_in), 1/sqrt(fan_in)).
    Weights stored as (in, out) = transpose of torch's (out, in); the uniform
    init is symmetric so the distribution is identical."""
    k1, k2, k3, kb1, kb2, kb3 = jax.random.split(key, 6)
    w1 = jax.random.uniform(k1, (state_dim, size), jnp.float32, -1e-3, 1e-3)
    w2 = jax.random.uniform(k2, (size, size), jnp.float32, -1e-3, 1e-3)
    w3 = jax.random.uniform(k3, (size, 1), jnp.float32, -1e-3, 1e-3)
    bnd1 = 1.0 / jnp.sqrt(state_dim)
    bnd2 = 1.0 / jnp.sqrt(size)
    b1 = jax.random.uniform(kb1, (1, size), jnp.float32, -bnd1, bnd1)
    b2 = jax.random.uniform(kb2, (1, size), jnp.float32, -bnd2, bnd2)
    b3 = jax.random.uniform(kb3, (1, 1), jnp.float32, -bnd2, bnd2)
    return w1, b1, w2, b2, w3, b3


if __name__ == "__main__":
    key = jax.random.PRNGKey(0)
    state_dim = 8
    batch = 2
    size = 256

    kx, kp = jax.random.split(key)
    x = jax.random.normal(kx, (batch, state_dim), jnp.float32)
    params = init_critic_params(kp, state_dim, size)

    out = critic_forward(x, *params)
    jax.block_until_ready(out)
    assert out.shape == (batch, 1)

    w1, b1, w2, b2, w3, b3 = params

    # Reference 1: same quantization path (bf16 MXU inputs, f32 accumulation).
    h1q = jnp.maximum(
        jnp.dot(x.astype(jnp.bfloat16), w1.astype(jnp.bfloat16),
                preferred_element_type=jnp.float32) + b1, 0.0)
    h2q = jnp.maximum(
        jnp.dot(h1q.astype(jnp.bfloat16), w2.astype(jnp.bfloat16),
                preferred_element_type=jnp.float32) + b2, 0.0)
    ref_q = jnp.sum(h2q * w3.astype(jnp.bfloat16).astype(jnp.float32).reshape(1, -1),
                    axis=-1, keepdims=True) + b3.reshape(1, 1)
    assert jnp.allclose(out, ref_q, atol=1e-3, rtol=1e-3)

    # Reference 2: pure f32 forward (module semantics), loose tolerance for
    # the bf16 input quantization.
    ref = jnp.maximum(x @ w1 + b1, 0.0)
    ref = jnp.maximum(ref @ w2 + b2, 0.0)
    ref = ref @ w3 + b3
    assert jnp.allclose(out, ref, atol=5e-3, rtol=5e-2)

    print("KERNEL_OK")
</pallas_src>

<mosaic_0001>
module attributes {stable_mosaic.version = 11 : i64} {
  func.func @critic_kernel(%arg0: i32, %arg1: memref<8x8xbf16, #tpu.memory_space<vmem>>, %arg2: memref<8x256xbf16, #tpu.memory_space<vmem>>, %arg3: memref<1x256xf32, #tpu.memory_space<vmem>>, %arg4: memref<256x256xbf16, #tpu.memory_space<vmem>>, %arg5: memref<1x256xf32, #tpu.memory_space<vmem>>, %arg6: memref<1x256xbf16, #tpu.memory_space<vmem>>, %arg7: memref<1x1xf32, #tpu.memory_space<smem>>, %arg8: memref<8x1xf32, #tpu.memory_space<vmem>>) attributes {dimension_semantics = [#tpu.dimension_semantics<parallel>], iteration_bounds = array<i64: 1>, scalar_prefetch = 0 : i64, scratch_operands = 0 : i64, tpu.core_type = #tpu.core_type<tc>, window_params = [{transform_indices = @transform_0, window_bounds = array<i64: 8, 8>}, {pipeline_mode = #tpu.pipeline_mode<synchronous>, transform_indices = @transform_1, window_bounds = array<i64: 8, 256>}, {pipeline_mode = #tpu.pipeline_mode<synchronous>, transform_indices = @transform_2, window_bounds = array<i64: 1, 256>}, {pipeline_mode = #tpu.pipeline_mode<synchronous>, transform_indices = @transform_3, window_bounds = array<i64: 256, 256>}, {pipeline_mode = #tpu.pipeline_mode<synchronous>, transform_indices = @transform_4, window_bounds = array<i64: 1, 256>}, {pipeline_mode = #tpu.pipeline_mode<synchronous>, transform_indices = @transform_5, window_bounds = array<i64: 1, 256>}, {transform_indices = @transform_6, window_bounds = array<i64: 1, 1>}, {transform_indices = @transform_7, window_bounds = array<i64: 8, 1>}]} {
    %c0 = arith.constant 0 : index
    %c0_0 = arith.constant 0 : index
    %0 = vector.load %arg1[%c0, %c0_0] : memref<8x8xbf16, #tpu.memory_space<vmem>>, vector<8x8xbf16>
    %c0_1 = arith.constant 0 : index
    %c0_2 = arith.constant 0 : index
    %1 = vector.load %arg2[%c0_1, %c0_2] : memref<8x256xbf16, #tpu.memory_space<vmem>>, vector<8x256xbf16>
    %cst = arith.constant dense<0.000000e+00> : vector<8x256xf32>
    %2 = tpu.matmul %0, %1, %cst {dimension_numbers = #tpu.dot_dimension_numbers<[1], [0], [0], [1], [0, 0, 1, 1], [], []>} : vector<8x8xbf16>, vector<8x256xbf16>, vector<8x256xf32> -> vector<8x256xf32>
    %c0_3 = arith.constant 0 : index
    %c0_4 = arith.constant 0 : index
    %3 = vector.load %arg3[%c0_3, %c0_4] : memref<1x256xf32, #tpu.memory_space<vmem>>, vector<1x256xf32>
    %4 = vector.broadcast %3 : vector<1x256xf32> to vector<8x256xf32>
    %5 = arith.addf %2, %4 : vector<8x256xf32>
    %cst_5 = arith.constant 0.000000e+00 : f32
    %6 = vector.broadcast %cst_5 : f32 to vector<8x256xf32>
    %7 = arith.maximumf %5, %6 : vector<8x256xf32>
    %8 = arith.truncf %7 : vector<8x256xf32> to vector<8x256xbf16>
    %c0_6 = arith.constant 0 : index
    %c0_7 = arith.constant 0 : index
    %9 = vector.load %arg4[%c0_6, %c0_7] : memref<256x256xbf16, #tpu.memory_space<vmem>>, vector<256x256xbf16>
    %cst_8 = arith.constant dense<0.000000e+00> : vector<8x256xf32>
    %10 = tpu.matmul %8, %9, %cst_8 {dimension_numbers = #tpu.dot_dimension_numbers<[1], [0], [0], [1], [0, 0, 1, 1], [], []>} : vector<8x256xbf16>, vector<256x256xbf16>, vector<8x256xf32> -> vector<8x256xf32>
    %c0_9 = arith.constant 0 : index
    %c0_10 = arith.constant 0 : index
    %11 = vector.load %arg5[%c0_9, %c0_10] : memref<1x256xf32, #tpu.memory_space<vmem>>, vector<1x256xf32>
    %12 = vector.broadcast %11 : vector<1x256xf32> to vector<8x256xf32>
    %13 = arith.addf %10, %12 : vector<8x256xf32>
    %cst_11 = arith.constant 0.000000e+00 : f32
    %14 = vector.broadcast %cst_11 : f32 to vector<8x256xf32>
    %15 = arith.maximumf %13, %14 : vector<8x256xf32>
    %c0_12 = arith.constant 0 : index
    %c0_13 = arith.constant 0 : index
    %16 = vector.load %arg6[%c0_12, %c0_13] : memref<1x256xbf16, #tpu.memory_space<vmem>>, vector<1x256xbf16>
    %17 = arith.extf %16 : vector<1x256xbf16> to vector<1x256xf32>
    %18 = vector.broadcast %17 : vector<1x256xf32> to vector<8x256xf32>
    %19 = arith.mulf %15, %18 : vector<8x256xf32>
    %cst_14 = arith.constant dense<0.000000e+00> : vector<8xf32>
    %20 = vector.multi_reduction <add>, %19, %cst_14 [1] : vector<8x256xf32> to vector<8xf32>
    %21 = vector.shape_cast %20 : vector<8xf32> to vector<8x1xf32>
    %c0_15 = arith.constant 0 : index
    %c0_16 = arith.constant 0 : index
    %22 = memref.load %arg7[%c0_15, %c0_16] : memref<1x1xf32, #tpu.memory_space<smem>>
    %23 = vector.broadcast %22 : f32 to vector<8x1xf32>
    %24 = arith.addf %21, %23 : vector<8x1xf32>
    %c0_17 = arith.constant 0 : index
    %c0_18 = arith.constant 0 : index
    %25 = vector.load %arg8[%c0_17, %c0_18] : memref<8x1xf32, #tpu.memory_space<vmem>>, vector<8x1xf32>
    tpu.vector_store %arg8[%c0_17, %c0_18], %24 {strides = array<i32>} : memref<8x1xf32, #tpu.memory_space<vmem>>, vector<8x1xf32>,
    return
  }
  func.func @transform_0(%arg0: i32) -> (i32, i32) {
    %c0_i32 = arith.constant 0 : i32
    %c0_i32_0 = arith.constant 0 : i32
    return %arg0, %c0_i32 : i32, i32
  }
  func.func @transform_1(%arg0: i32) -> (i32, i32) {
    %c0_i32 = arith.constant 0 : i32
    %c0_i32_0 = arith.constant 0 : i32
    %c0_i32_1 = arith.constant 0 : i32
    return %c0_i32, %c0_i32_0 : i32, i32
  }
  func.func @transform_2(%arg0: i32) -> (i32, i32) {
    %c0_i32 = arith.constant 0 : i32
    %c0_i32_0 = arith.constant 0 : i32
    %c0_i32_1 = arith.constant 0 : i32
    return %c0_i32, %c0_i32_0 : i32, i32
  }
  func.func @transform_3(%arg0: i32) -> (i32, i32) {
    %c0_i32 = arith.constant 0 : i32
    %c0_i32_0 = arith.constant 0 : i32
    %c0_i32_1 = arith.constant 0 : i32
    return %c0_i32, %c0_i32_0 : i32, i32
  }
  func.func @transform_4(%arg0: i32) -> (i32, i32) {
    %c0_i32 = arith.constant 0 : i32
    %c0_i32_0 = arith.constant 0 : i32
    %c0_i32_1 = arith.constant 0 : i32
    return %c0_i32, %c0_i32_0 : i32, i32
  }
  func.func @transform_5(%arg0: i32) -> (i32, i32) {
    %c0_i32 = arith.constant 0 : i32
    %c0_i32_0 = arith.constant 0 : i32
    %c0_i32_1 = arith.constant 0 : i32
    return %c0_i32, %c0_i32_0 : i32, i32
  }
  func.func @transform_6(%arg0: i32) -> (i32, i32) {
    %c0_i32 = arith.constant 0 : i32
    %c0_i32_0 = arith.constant 0 : i32
    %c0_i32_1 = arith.constant 0 : i32
    return %c0_i32, %c0_i32_0 : i32, i32
  }
  func.func @transform_7(%arg0: i32) -> (i32, i32) {
    %c0_i32 = arith.constant 0 : i32
    %c0_i32_0 = arith.constant 0 : i32
    return %arg0, %c0_i32 : i32, i32
  }
}

</mosaic_0001>

<llo_original>
// kernel: critic_forward.1
$region0: #{critic_forward.1}
  #allocation0 [shape = 'u32[]', space=smem, size = 0x4, offset = 0x4, fixed_abs, tag = 'smem constant byte address 0x4 - core index']
  #allocation1 [shape = 'u32[144,128]{1,0:T(1,128)}', space=vmem, size = 0x12000, scoped, tag = 'internal scratch']
  #allocation2 [shape = 'f32[1,1]{1,0:T(1,128)S(6)}', space=smem, size = 0x200, scoped, tag = 'scoped memory for critic_forward.1']
  %s0 = inlined_call_operand.vmem [shape: bf16[8,8], index: 0, kind: input, shape index: {}]
  %s1 = inlined_call_operand.vmem [shape: bf16[8,256], index: 1, kind: input, shape index: {}]
  %s2 = inlined_call_operand.vmem [shape: f32[1,256], index: 2, kind: input, shape index: {}]
  %s3 = inlined_call_operand.vmem [shape: bf16[256,256], index: 3, kind: input, shape index: {}]
  %s4 = inlined_call_operand.vmem [shape: f32[1,256], index: 4, kind: input, shape index: {}]
  %s5 = inlined_call_operand.vmem [shape: bf16[1,256], index: 5, kind: input, shape index: {}]
  %s6 = inlined_call_operand.<no memory space> [shape: f32[1,1], index: 6, kind: input, shape index: {}]
  %s7 = inlined_call_operand.vmem [shape: f32[8,1], index: 7, kind: output, shape index: {}]
  %s8 = sld [smem:[#allocation0]]
  $region38: #{critic_forward.1} parent=0
    _
  %s10 = ssub.s32 1, %s8
  %s11 = scalar_select 0, %s10, %s8
  %12 = sst [smem:[#allocation2]] %s6
  // Predicated region
  $region2: #{critic_forward.1} parent=0 // pred_check
    _
  $region3: #{critic_forward.1} parent=0 // pred_check_branch
    %14 = sbr.rel (0) target = $region5
  $region4: #{critic_forward.1} parent=0 // pred_region
    _
  $region5: #{critic_forward.1} parent=0 // pred_fallthru
    _
  // Predicated region
  $region6: #{critic_forward.1} parent=0 // pred_check
    _
  $region7: #{critic_forward.1} parent=0 // pred_check_branch
    %16 = sbr.rel (0) target = $region9
  $region8: #{critic_forward.1} parent=0 // pred_region
    _
  $region9: #{critic_forward.1} parent=0 // pred_fallthru
    _
  // Predicated region
  $region10: #{critic_forward.1} parent=0 // pred_check
    _
  $region11: #{critic_forward.1} parent=0 // pred_check_branch
    %18 = sbr.rel (0) target = $region13
  $region12: #{critic_forward.1} parent=0 // pred_region
    _
  $region13: #{critic_forward.1} parent=0 // pred_fallthru
    _
  // Predicated region
  $region14: #{critic_forward.1} parent=0 // pred_check
    _
  $region15: #{critic_forward.1} parent=0 // pred_check_branch
    %20 = sbr.rel (0) target = $region17
  $region16: #{critic_forward.1} parent=0 // pred_region
    _
  $region17: #{critic_forward.1} parent=0 // pred_fallthru
    _
  // Predicated region
  $region18: #{critic_forward.1} parent=0 // pred_check
    _
  $region19: #{critic_forward.1} parent=0 // pred_check_branch
    %22 = sbr.rel (0) target = $region21
  $region20: #{critic_forward.1} parent=0 // pred_region
    _
  $region21: #{critic_forward.1} parent=0 // pred_fallthru
    _
  // Predicated region
  $region22: #{critic_forward.1} parent=0 // pred_check
    _
  $region23: #{critic_forward.1} parent=0 // pred_check_branch
    %24 = sbr.rel (0) target = $region25
  $region24: #{critic_forward.1} parent=0 // pred_region
    _
  $region25: #{critic_forward.1} parent=0 // pred_fallthru
    _
  // Predicated region
  $region26: #{critic_forward.1} parent=0 // pred_check
    _
  $region27: #{critic_forward.1} parent=0 // pred_check_branch
    %26 = sbr.rel (0) target = $region29
  $region28: #{critic_forward.1} parent=0 // pred_region
    _
  $region29: #{critic_forward.1} parent=0 // pred_fallthru
    _
  %v28 = vld [vmem:[%s0] sm:$0xf]
  %v29 = vld [vmem:[%s1] sm:$0xff]
  %v30 = vld [vmem:[%s2] sm:$0x3]
  %v32 = vlaneseq
  %v33 = vshrl.u32 %v32, 7
  %v34 = vsub.s32 0, %v33
  %v35 = vrot.slane %v30, %v34
  %v36 = vlaneseq
  %v37 = vshrl.u32 %v36, 7
  %v38 = vsub.s32 1, %v37
  %v39 = vrot.slane %v30, %v38
  %v43 = vunpack.c.l.b16 %v29
  %v44 = vunpack.c.h.b16 %v29
  %v45 = vpack.c.b16 %v43, %v43
  %v46 = vpack.c.b16 %v44, %v44
  %vm47 = vcmask 64512
  %v49 = vsel %vm47, %v28, 0
  %vm51 = vcmask 1043456
  %v53 = vsel %vm51, %v45, 0
  %v56 = vsel %vm51, %v46, 0
  %58 = vmatprep.subr.bf16.mxu0 %v56
  %59 = vmatpush1.bf16.msra.mxu0 %v53
  %60 = vmatprep.subr.bf16.mxu0 0
  %61 = vmatpush1.bf16.msra.mxu0 0
  %62 = vmatprep.subr.bf16.mxu0 0
  %63 = vmatpush1.bf16.msra.mxu0 0
  %64 = vmatprep.subr.bf16.mxu0 0
  %65 = vmatpush1.bf16.msra.mxu0 0
  %66 = vmatprep.subr.bf16.mxu0 0
  %67 = vmatpush1.bf16.msra.mxu0 0
  %68 = vmatprep.subr.bf16.mxu0 0
  %69 = vmatpush1.bf16.msra.mxu0 0
  %70 = vmatprep.subr.bf16.mxu0 0
  %71 = vmatpush1.bf16.msra.mxu0 0
  %72 = vmatprep.subr.bf16.mxu0 0
  %73 = vmatpush1.bf16.msra.mxu0 0
  %74 = vmatprep.subr.bf16.mxu0 0
  %75 = vmatpush1.bf16.msra.mxu0 0
  %76 = vmatprep.subr.bf16.mxu0 0
  %77 = vmatpush1.bf16.msra.mxu0 0
  %78 = vmatprep.subr.bf16.mxu0 0
  %79 = vmatpush1.bf16.msra.mxu0 0
  %80 = vmatprep.subr.bf16.mxu0 0
  %81 = vmatpush1.bf16.msra.mxu0 0
  %82 = vmatprep.subr.bf16.mxu0 0
  %83 = vmatpush1.bf16.msra.mxu0 0
  %84 = vmatprep.subr.bf16.mxu0 0
  %85 = vmatpush1.bf16.msra.mxu0 0
  %86 = vmatprep.subr.bf16.mxu0 0
  %87 = vmatpush1.bf16.msra.mxu0 0
  %88 = vmatprep.subr.bf16.mxu0 0
  %89 = vmatpush1.bf16.msra.mxu0 0
  %90 = vmatprep.mubr.bf16.mxu0 0
  %91 = vmatmul.mubr.bf16.gmra.mrb[0].mxu0 %v49
  %v92 = vpop.f32.mrb[0].mxu0
  %v93 = vadd.f32 %v35, %v92
  %v94 = vpop.f32.mrb[0].mxu0
  %v95 = vadd.f32 %v39, %v94
  %v96 = vpop.f32.mrb[0].mxu0
  %v97 = vpop.f32.mrb[0].mxu0
  %98 = vdwg.mxu0
  %v99 = vmax.f32 %v93, 0.0
  %v100 = vmax.f32 %v95, 0.0
  %v101 = vpack.c.bf16 %v99, %v99
  %v102 = vpack.c.bf16 %v100, %v100
  %v103 = vld [vmem:[%s3] sm:$0xff]
  %v104 = vld [vmem:[%s3 + $0x8] sm:$0xff]
  %v105 = vld [vmem:[%s3 + $0x10] sm:$0xff]
  %v106 = vld [vmem:[%s3 + $0x18] sm:$0xff]
  %v107 = vld [vmem:[%s3 + $0x20] sm:$0xff]
  %v108 = vld [vmem:[%s3 + $0x28] sm:$0xff]
  %v109 = vld [vmem:[%s3 + $0x30] sm:$0xff]
  %v110 = vld [vmem:[%s3 + $0x38] sm:$0xff]
  %v111 = vld [vmem:[%s3 + $0x40] sm:$0xff]
  %v112 = vld [vmem:[%s3 + $0x48] sm:$0xff]
  %v113 = vld [vmem:[%s3 + $0x50] sm:$0xff]
  %v114 = vld [vmem:[%s3 + $0x58] sm:$0xff]
  %v115 = vld [vmem:[%s3 + $0x60] sm:$0xff]
  %v116 = vld [vmem:[%s3 + $0x68] sm:$0xff]
  %v117 = vld [vmem:[%s3 + $0x70] sm:$0xff]
  %v118 = vld [vmem:[%s3 + $0x78] sm:$0xff]
  %v119 = vld [vmem:[%s3 + $0x80] sm:$0xff]
  %v120 = vld [vmem:[%s3 + $0x88] sm:$0xff]
  %v121 = vld [vmem:[%s3 + $0x90] sm:$0xff]
  %v122 = vld [vmem:[%s3 + $0x98] sm:$0xff]
  %v123 = vld [vmem:[%s3 + $0xa0] sm:$0xff]
  %v124 = vld [vmem:[%s3 + $0xa8] sm:$0xff]
  %v125 = vld [vmem:[%s3 + $0xb0] sm:$0xff]
  %v126 = vld [vmem:[%s3 + $0xb8] sm:$0xff]
  %v127 = vld [vmem:[%s3 + $0xc0] sm:$0xff]
  %v128 = vld [vmem:[%s3 + $0xc8] sm:$0xff]
  %v129 = vld [vmem:[%s3 + $0xd0] sm:$0xff]
  %v130 = vld [vmem:[%s3 + $0xd8] sm:$0xff]
  %v131 = vld [vmem:[%s3 + $0xe0] sm:$0xff]
  %v132 = vld [vmem:[%s3 + $0xe8] sm:$0xff]
  %v133 = vld [vmem:[%s3 + $0xf0] sm:$0xff]
  %v134 = vld [vmem:[%s3 + $0xf8] sm:$0xff]
  %v135 = vld [vmem:[%s4] sm:$0x3]
  %v137 = vlaneseq
  %v138 = vshrl.u32 %v137, 7
  %v139 = vsub.s32 0, %v138
  %v140 = vrot.slane %v135, %v139
  %v141 = vlaneseq
  %v142 = vshrl.u32 %v141, 7
  %v143 = vsub.s32 1, %v142
  %v144 = vrot.slane %v135, %v143
  %v179 = vunpack.c.l.b16 %v103
  %v180 = vunpack.c.h.b16 %v103
  %v181 = vunpack.c.l.b16 %v104
  %v182 = vunpack.c.h.b16 %v104
  %v183 = vunpack.c.l.b16 %v105
  %v184 = vunpack.c.h.b16 %v105
  %v185 = vunpack.c.l.b16 %v106
  %v186 = vunpack.c.h.b16 %v106
  %v187 = vunpack.c.l.b16 %v107
  %v188 = vunpack.c.h.b16 %v107
  %v189 = vunpack.c.l.b16 %v108
  %v190 = vunpack.c.h.b16 %v108
  %v191 = vunpack.c.l.b16 %v109
  %v192 = vunpack.c.h.b16 %v109
  %v193 = vunpack.c.l.b16 %v110
  %v194 = vunpack.c.h.b16 %v110
  %v195 = vunpack.c.l.b16 %v111
  %v196 = vunpack.c.h.b16 %v111
  %v197 = vunpack.c.l.b16 %v112
  %v198 = vunpack.c.h.b16 %v112
  %v199 = vunpack.c.l.b16 %v113
  %v200 = vunpack.c.h.b16 %v113
  %v201 = vunpack.c.l.b16 %v114
  %v202 = vunpack.c.h.b16 %v114
  %v203 = vunpack.c.l.b16 %v115
  %v204 = vunpack.c.h.b16 %v115
  %v205 = vunpack.c.l.b16 %v116
  %v206 = vunpack.c.h.b16 %v116
  %v207 = vunpack.c.l.b16 %v117
  %v208 = vunpack.c.h.b16 %v117
  %v209 = vunpack.c.l.b16 %v118
  %v210 = vunpack.c.h.b16 %v118
  %v211 = vunpack.c.l.b16 %v119
  %v212 = vunpack.c.h.b16 %v119
  %v213 = vunpack.c.l.b16 %v120
  %v214 = vunpack.c.h.b16 %v120
  %v215 = vunpack.c.l.b16 %v121
  %v216 = vunpack.c.h.b16 %v121
  %v217 = vunpack.c.l.b16 %v122
  %v218 = vunpack.c.h.b16 %v122
  %v219 = vunpack.c.l.b16 %v123
  %v220 = vunpack.c.h.b16 %v123
  %v221 = vunpack.c.l.b16 %v124
  %v222 = vunpack.c.h.b16 %v124
  %v223 = vunpack.c.l.b16 %v125
  %v224 = vunpack.c.h.b16 %v125
  %v225 = vunpack.c.l.b16 %v126
  %v226 = vunpack.c.h.b16 %v126
  %v227 = vunpack.c.l.b16 %v127
  %v228 = vunpack.c.h.b16 %v127
  %v229 = vunpack.c.l.b16 %v128
  %v230 = vunpack.c.h.b16 %v128
  %v231 = vunpack.c.l.b16 %v129
  %v232 = vunpack.c.h.b16 %v129
  %v233 = vunpack.c.l.b16 %v130
  %v234 = vunpack.c.h.b16 %v130
  %v235 = vunpack.c.l.b16 %v131
  %v236 = vunpack.c.h.b16 %v131
  %v237 = vunpack.c.l.b16 %v132
  %v238 = vunpack.c.h.b16 %v132
  %v239 = vunpack.c.l.b16 %v133
  %v240 = vunpack.c.h.b16 %v133
  %v241 = vunpack.c.l.b16 %v134
  %v242 = vunpack.c.h.b16 %v134
  %v243 = vpack.c.b16 %v181, %v179
  %v244 = vpack.c.b16 %v182, %v180
  %v245 = vpack.c.b16 %v185, %v183
  %v246 = vpack.c.b16 %v186, %v184
  %v247 = vpack.c.b16 %v189, %v187
  %v248 = vpack.c.b16 %v190, %v188
  %v249 = vpack.c.b16 %v193, %v191
  %v250 = vpack.c.b16 %v194, %v192
  %v251 = vpack.c.b16 %v197, %v195
  %v252 = vpack.c.b16 %v198, %v196
  %v253 = vpack.c.b16 %v201, %v199
  %v254 = vpack.c.b16 %v202, %v200
  %v255 = vpack.c.b16 %v205, %v203
  %v256 = vpack.c.b16 %v206, %v204
  %v257 = vpack.c.b16 %v209, %v207
  %v258 = vpack.c.b16 %v210, %v208
  %v259 = vpack.c.b16 %v213, %v211
  %v260 = vpack.c.b16 %v214, %v212
  %v261 = vpack.c.b16 %v217, %v215
  %v262 = vpack.c.b16 %v218, %v216
  %v263 = vpack.c.b16 %v221, %v219
  %v264 = vpack.c.b16 %v222, %v220
  %v265 = vpack.c.b16 %v225, %v223
  %v266 = vpack.c.b16 %v226, %v224
  %v267 = vpack.c.b16 %v229, %v227
  %v268 = vpack.c.b16 %v230, %v228
  %v269 = vpack.c.b16 %v233, %v231
  %v270 = vpack.c.b16 %v234, %v232
  %v271 = vpack.c.b16 %v237, %v235
  %v272 = vpack.c.b16 %v238, %v236
  %v273 = vpack.c.b16 %v241, %v239
  %v274 = vpack.c.b16 %v242, %v240
  %307 = vmatprep.subr.bf16.mxu0 %v244
  %308 = vmatpush1.bf16.msra.mxu0 %v243
  %309 = vmatprep.subr.bf16.mxu0 %v246
  %310 = vmatpush1.bf16.msra.mxu0 %v245
  %311 = vmatprep.subr.bf16.mxu0 %v248
  %312 = vmatpush1.bf16.msra.mxu0 %v247
  %313 = vmatprep.subr.bf16.mxu0 %v250
  %314 = vmatpush1.bf16.msra.mxu0 %v249
  %315 = vmatprep.subr.bf16.mxu0 %v252
  %316 = vmatpush1.bf16.msra.mxu0 %v251
  %317 = vmatprep.subr.bf16.mxu0 %v254
  %318 = vmatpush1.bf16.msra.mxu0 %v253
  %319 = vmatprep.subr.bf16.mxu0 %v256
  %320 = vmatpush1.bf16.msra.mxu0 %v255
  %321 = vmatprep.subr.bf16.mxu0 %v258
  %322 = vmatpush1.bf16.msra.mxu0 %v257
  %323 = vmatprep.subr.bf16.mxu0 %v260
  %324 = vmatpush1.bf16.msra.mxu0 %v259
  %325 = vmatprep.subr.bf16.mxu0 %v262
  %326 = vmatpush1.bf16.msra.mxu0 %v261
  %327 = vmatprep.subr.bf16.mxu0 %v264
  %328 = vmatpush1.bf16.msra.mxu0 %v263
  %329 = vmatprep.subr.bf16.mxu0 %v266
  %330 = vmatpush1.bf16.msra.mxu0 %v265
  %331 = vmatprep.subr.bf16.mxu0 %v268
  %332 = vmatpush1.bf16.msra.mxu0 %v267
  %333 = vmatprep.subr.bf16.mxu0 %v270
  %334 = vmatpush1.bf16.msra.mxu0 %v269
  %335 = vmatprep.subr.bf16.mxu0 %v272
  %336 = vmatpush1.bf16.msra.mxu0 %v271
  %337 = vmatprep.subr.bf16.mxu0 %v274
  %338 = vmatpush1.bf16.msra.mxu0 %v273
  %339 = vmatprep.mubr.bf16.mxu0 %v102
  %340 = vmatmul.mubr.bf16.gmra.mrb[0].mxu0 %v101
  %v341 = vpop.f32.mrb[0].mxu0
  %v342 = vadd.f32 %v140, %v341
  %v343 = vpop.f32.mrb[0].mxu0
  %v344 = vadd.f32 %v144, %v343
  %v345 = vpop.f32.mrb[0].mxu0
  %v346 = vpop.f32.mrb[0].mxu0
  %347 = vdwg.mxu0
  %v348 = vmax.f32 %v342, 0.0
  %v349 = vmax.f32 %v344, 0.0
  %v350 = vld [vmem:[%s5] sm:$0x3]
  %v351 = vunpack.c.l.bf16 %v350
  %v353 = vlaneseq
  %v354 = vshrl.u32 %v353, 7
  %v355 = vsub.s32 0, %v354
  %v356 = vrot.slane %v351, %v355
  %v357 = vlaneseq
  %v358 = vshrl.u32 %v357, 7
  %v359 = vsub.s32 2, %v358
  %v360 = vrot.slane %v351, %v359
  %v363 = vlaneseq
  %v364 = vshrl.u32 %v363, 7
  %v365 = vsub.s32 0, %v364
  %v366 = vrot.slane %v356, %v365
  %v367 = vlaneseq
  %v368 = vshrl.u32 %v367, 7
  %v369 = vsub.s32 0, %v368
  %v370 = vrot.slane %v360, %v369
  %v371 = vmul.f32 %v348, %v366
  %v372 = vmul.f32 %v349, %v370
  %v373 = vadd.f32 %v371, %v372
  %374 = vadd.xlane.f32.xlu0 %v373
  %v375 = vpop.xlane.xlu0 %374
  %s376 = sld [smem:[#allocation2]]
  %v377 = vstv %s376
  %v378 = vadd.f32 %v375, %v377
  %vm379 = vcmask 7168
  %380 = vst.msk [vmem:[%s7] sm:$0xff] %vm379, %v378
  // Predicated region
  $region30: #{critic_forward.1} parent=0 // pred_check
    _
  $region31: #{critic_forward.1} parent=0 // pred_check_branch
    %382 = sbr.rel (0) target = $region33
  $region32: #{critic_forward.1} parent=0 // pred_region
    _
  $region33: #{critic_forward.1} parent=0 // pred_fallthru
    _
  // Predicated region
  $region34: #{critic_forward.1} parent=0 // pred_check
    _
  $region35: #{critic_forward.1} parent=0 // pred_check_branch
    %384 = sbr.rel (0) target = $region37
  $region36: #{critic_forward.1} parent=0 // pred_region
    _
  $region37: #{critic_forward.1} parent=0 // pred_fallthru
    _

</llo_original>
